<compile_context>
chip_gen: v5e
topology: v5e:2x2
jax: 0.10.0
libtpu: 0.0.40
codegen_flags: <defaults>
</compile_context>

<pallas_src>
import math

import jax
import jax.numpy as jnp
from jax.experimental import pallas as pl
from jax.experimental.pallas import tpu as pltpu


def _make_conv_kernel(shifts, lanes):
    """Builds the conv-as-GEMM kernel.

    x_ref : (Cin, BN*HW)        channel-major image block, spatial in lanes
    w_ref : (KH*KW, Cout, Cin)  per-tap weight slabs (t channel already folded)
    b_ref : (Cout, 1)           effective bias (t contribution folded in)
    o_ref : (Cout, BN*HW)       channel-major output block
    acc   : (Cout, BN*HW) f32   VMEM scratch accumulator
    """

    def kernel(x_ref, w_ref, b_ref, o_ref, acc_ref):
        x = x_ref[...]
        # Bias broadcast exactly once per grid step (hoisted out of any loop).
        acc_ref[...] = jnp.broadcast_to(b_ref[...], acc_ref.shape).astype(jnp.float32)
        for tap, shift in enumerate(shifts):
            # im2col tap (kh, kw) == flat image shifted left by kh*Wp + kw,
            # built in VMEM via an XLU lane rotation (no HBM patches array).
            # Wrapped-around lanes only ever land on output positions with
            # oh >= OH or ow >= OW, which the wrapper crops.
            xt = x if shift == 0 else pltpu.roll(x, shift=lanes - shift, axis=1)
            acc_ref[...] += jnp.dot(w_ref[tap], xt,
                                    preferred_element_type=jnp.float32)
        o_ref[...] = acc_ref[...].astype(o_ref.dtype)

    return kernel


def concat_conv2d(t, x_nchw, w_oihw, bias, *, stride=1, padding=0, dilation=1):
    """Forward of ConcatConv2d. x_nchw: (N, C, H, W) float32, t: scalar."""
    assert stride == 1 and dilation == 1, "module defaults only"
    N, C, H, W = x_nchw.shape
    Cout, Cin_w, KH, KW = w_oihw.shape
    assert Cin_w == C + 1

    # ---- glue (plain JAX): fold the constant t channel into the bias --------
    if padding == 0:
        # t channel is spatially constant -> exact fold into the bias.
        x_eff = x_nchw                                   # (N, C, H, W), untouched
        w_eff = w_oihw[:, 1:]                            # drop the t channel
        b_eff = bias + t * jnp.sum(w_oihw[:, 0], axis=(1, 2))
    else:
        # With padding > 0 the t channel is zero-padded at the borders, so the
        # fold is not exact; build it explicitly (non-default path).
        tt = jnp.full((N, 1, H, W), t, dtype=x_nchw.dtype)
        x_eff = jnp.concatenate([tt, x_nchw], axis=1)
        x_eff = jnp.pad(x_eff, ((0, 0), (0, 0),
                                (padding, padding), (padding, padding)))
        w_eff = w_oihw
        b_eff = bias

    Ne, Ce, Hp, Wp = x_eff.shape
    OH, OW = Hp - KH + 1, Wp - KW + 1
    HW = Hp * Wp
    K = KH * KW * Ce

    # ---- glue: channel-major lane-dense layouts (single XLA pass over x) ----
    x2 = jnp.transpose(x_eff, (1, 0, 2, 3)).reshape(Ce, Ne * HW)      # (Ce, Ne*HW)
    w3 = jnp.transpose(w_eff, (2, 3, 0, 1)).reshape(KH * KW, Cout, Ce)
    b2 = b_eff.reshape(Cout, 1).astype(jnp.float32)

    # ---- batch blocking: derive BN from the VMEM budget ----------------------
    VMEM_LIMIT = 48 * 1024 * 1024     # fits every gen (v7x has 64 MiB physical)
    # Per-image footprint per grid step: 2x double-buffered in/out blocks,
    # the f32 accumulator and one rolled temporary (all f32-sized).
    per_img = 4 * HW * (3 * Ce + 3 * Cout)
    bn_mem = max(1, (VMEM_LIMIT // 2) // per_img)
    # Keep >= 2 grid steps so dimension_semantics=("parallel",) can shard the
    # batch axis across v7x's two TensorCores.
    bn_cap = Ne if Ne < 2 else pl.cdiv(Ne, 2)
    BN = min(bn_mem, bn_cap, Ne)
    # Lane alignment: BN*HW must be a multiple of 128 (or the full extent).
    bn_unit = 128 // math.gcd(HW, 128)
    BN = (BN // bn_unit) * bn_unit
    if BN < 1 or (BN * HW) % 128 != 0:
        BN = Ne                                           # full extent is always legal
    grid = (pl.cdiv(Ne, BN),)

    shifts = [kh * Wp + kw for kh in range(KH) for kw in range(KW)]
    kernel = _make_conv_kernel(shifts, BN * HW)

    # Cost estimate for the new (no-patches) data flow.
    flops = 2 * Ne * Cout * K * HW
    bytes_accessed = 4 * (Ce * Ne * HW            # x read once
                          + KH * KW * Cout * Ce   # weights
                          + Cout                  # bias
                          + Cout * Ne * HW)       # output write

    out2 = pl.pallas_call(
        kernel,
        out_shape=jax.ShapeDtypeStruct((Cout, Ne * HW), x_nchw.dtype),
        grid=grid,
        in_specs=[
            pl.BlockSpec((Ce, BN * HW), lambda n: (0, n)),
            pl.BlockSpec((KH * KW, Cout, Ce), lambda n: (0, 0, 0)),
            pl.BlockSpec((Cout, 1), lambda n: (0, 0)),
        ],
        out_specs=pl.BlockSpec((Cout, BN * HW), lambda n: (0, n)),
        scratch_shapes=[pltpu.VMEM((Cout, BN * HW), jnp.float32)],
        compiler_params=pltpu.CompilerParams(
            dimension_semantics=("parallel",),
            vmem_limit_bytes=VMEM_LIMIT,
        ),
        cost_estimate=pl.CostEstimate(
            flops=int(flops), transcendentals=0,
            bytes_accessed=int(bytes_accessed)),
    )(x2, w3, b2)

    # (Cout, Ne, Hp, Wp) -> crop + transpose to NCHW in a single fused XLA pass.
    y = out2.reshape(Cout, Ne, Hp, Wp)[:, :, :OH, :OW]
    return jnp.transpose(y, (1, 0, 2, 3))


def _reference(t, x_nchw, w_oihw, bias, padding=0):
    """Pure-JAX reference (lax.conv) for correctness checking."""
    N, C, H, W = x_nchw.shape
    tt = jnp.full((N, 1, H, W), t, dtype=x_nchw.dtype)
    ttx = jnp.concatenate([tt, x_nchw], axis=1)
    y = jax.lax.conv_general_dilated(
        ttx, w_oihw, window_strides=(1, 1),
        padding=[(padding, padding), (padding, padding)],
        dimension_numbers=("NCHW", "OIHW", "NCHW"))
    return y + bias[None, :, None, None]


if __name__ == "__main__":
    # Module hyperparameters (defaults of ConcatConv2d).
    dim_in, dim_out, ksize = 4, 8, 3
    N, H, W = 2, 16, 16

    key = jax.random.PRNGKey(0)
    kx, kt, kwkey, kb = jax.random.split(key, 4)

    x = jax.random.normal(kx, (N, dim_in, H, W), dtype=jnp.float32)
    t = jax.random.uniform(kt, (), dtype=jnp.float32)

    # Deterministic PyTorch-style init: U(-1/sqrt(fan_in), 1/sqrt(fan_in)).
    fan_in = (dim_in + 1) * ksize * ksize
    bound = 1.0 / math.sqrt(fan_in)
    w = jax.random.uniform(kwkey, (dim_out, dim_in + 1, ksize, ksize),
                           minval=-bound, maxval=bound, dtype=jnp.float32)
    b = jax.random.uniform(kb, (dim_out,),
                           minval=-bound, maxval=bound, dtype=jnp.float32)

    out = jax.block_until_ready(concat_conv2d(t, x, w, b))
    ref = jax.block_until_ready(_reference(t, x, w, b))

    assert out.shape == (N, dim_out, H - ksize + 1, W - ksize + 1), out.shape
    max_err = float(jnp.max(jnp.abs(out - ref)))
    assert jnp.allclose(out, ref, atol=1e-4, rtol=1e-4), max_err

    print("KERNEL_OK")
</pallas_src>

<mosaic_0001>
module attributes {stable_mosaic.version = 11 : i64} {
  func.func @kernel(%arg0: i32, %arg1: memref<4x256xf32, #tpu.memory_space<vmem>>, %arg2: memref<9x8x4xf32, #tpu.memory_space<vmem>>, %arg3: memref<8x1xf32, #tpu.memory_space<vmem>>, %arg4: memref<8x256xf32, #tpu.memory_space<vmem>>, %arg5: memref<8x256xf32, #tpu.memory_space<vmem>>) attributes {dimension_semantics = [#tpu.dimension_semantics<parallel>], iteration_bounds = array<i64: 2>, scalar_prefetch = 0 : i64, scratch_operands = 1 : i64, tpu.core_type = #tpu.core_type<tc>, window_params = [{transform_indices = @transform_0, window_bounds = array<i64: 4, 256>}, {pipeline_mode = #tpu.pipeline_mode<synchronous>, transform_indices = @transform_1, window_bounds = array<i64: 9, 8, 4>}, {pipeline_mode = #tpu.pipeline_mode<synchronous>, transform_indices = @transform_2, window_bounds = array<i64: 8, 1>}, {transform_indices = @transform_3, window_bounds = array<i64: 8, 256>}]} {
    %c0 = arith.constant 0 : index
    %c0_0 = arith.constant 0 : index
    %0 = vector.load %arg1[%c0, %c0_0] : memref<4x256xf32, #tpu.memory_space<vmem>>, vector<4x256xf32>
    %c0_1 = arith.constant 0 : index
    %c0_2 = arith.constant 0 : index
    %1 = vector.load %arg3[%c0_1, %c0_2] : memref<8x1xf32, #tpu.memory_space<vmem>>, vector<8x1xf32>
    %2 = vector.shape_cast %1 : vector<8x1xf32> to vector<8x1xf32>
    %3 = vector.broadcast %2 : vector<8x1xf32> to vector<8x256xf32>
    %c0_3 = arith.constant 0 : index
    %c0_4 = arith.constant 0 : index
    %4 = vector.load %arg5[%c0_3, %c0_4] : memref<8x256xf32, #tpu.memory_space<vmem>>, vector<8x256xf32>
    tpu.vector_store %arg5[%c0_3, %c0_4], %3 {strides = array<i32>} : memref<8x256xf32, #tpu.memory_space<vmem>>, vector<8x256xf32>,
    %c0_5 = arith.constant 0 : index
    %c0_6 = arith.constant 0 : index
    %5 = vector.load %arg5[%c0_5, %c0_6] : memref<8x256xf32, #tpu.memory_space<vmem>>, vector<8x256xf32>
    %c0_7 = arith.constant 0 : index
    %c0_8 = arith.constant 0 : index
    %c0_9 = arith.constant 0 : index
    %6 = vector.load %arg2[%c0_7, %c0_8, %c0_9] : memref<9x8x4xf32, #tpu.memory_space<vmem>>, vector<1x8x4xf32>
    %7 = vector.shape_cast %6 : vector<1x8x4xf32> to vector<8x4xf32>
    %cst = arith.constant dense<0.000000e+00> : vector<8x256xf32>
    %8 = tpu.matmul %7, %0, %cst {dimension_numbers = #tpu.dot_dimension_numbers<[1], [0], [0], [1], [0, 0, 1, 1], [], []>} : vector<8x4xf32>, vector<4x256xf32>, vector<8x256xf32> -> vector<8x256xf32>
    %9 = arith.addf %5, %8 : vector<8x256xf32>
    %c0_10 = arith.constant 0 : index
    %c0_11 = arith.constant 0 : index
    %10 = vector.load %arg5[%c0_10, %c0_11] : memref<8x256xf32, #tpu.memory_space<vmem>>, vector<8x256xf32>
    tpu.vector_store %arg5[%c0_10, %c0_11], %9 {strides = array<i32>} : memref<8x256xf32, #tpu.memory_space<vmem>>, vector<8x256xf32>,
    %c255_i32 = arith.constant 255 : i32
    %11 = tpu.dynamic_rotate %0 by %c255_i32 dim 1 : vector<4x256xf32>, i32 -> vector<4x256xf32>
    %c0_12 = arith.constant 0 : index
    %c0_13 = arith.constant 0 : index
    %12 = vector.load %arg5[%c0_12, %c0_13] : memref<8x256xf32, #tpu.memory_space<vmem>>, vector<8x256xf32>
    %c1 = arith.constant 1 : index
    %c0_14 = arith.constant 0 : index
    %c0_15 = arith.constant 0 : index
    %13 = vector.load %arg2[%c1, %c0_14, %c0_15] : memref<9x8x4xf32, #tpu.memory_space<vmem>>, vector<1x8x4xf32>
    %14 = vector.shape_cast %13 : vector<1x8x4xf32> to vector<8x4xf32>
    %cst_16 = arith.constant dense<0.000000e+00> : vector<8x256xf32>
    %15 = tpu.matmul %14, %11, %cst_16 {dimension_numbers = #tpu.dot_dimension_numbers<[1], [0], [0], [1], [0, 0, 1, 1], [], []>} : vector<8x4xf32>, vector<4x256xf32>, vector<8x256xf32> -> vector<8x256xf32>
    %16 = arith.addf %12, %15 : vector<8x256xf32>
    %c0_17 = arith.constant 0 : index
    %c0_18 = arith.constant 0 : index
    %17 = vector.load %arg5[%c0_17, %c0_18] : memref<8x256xf32, #tpu.memory_space<vmem>>, vector<8x256xf32>
    tpu.vector_store %arg5[%c0_17, %c0_18], %16 {strides = array<i32>} : memref<8x256xf32, #tpu.memory_space<vmem>>, vector<8x256xf32>,
    %c254_i32 = arith.constant 254 : i32
    %18 = tpu.dynamic_rotate %0 by %c254_i32 dim 1 : vector<4x256xf32>, i32 -> vector<4x256xf32>
    %c0_19 = arith.constant 0 : index
    %c0_20 = arith.constant 0 : index
    %19 = vector.load %arg5[%c0_19, %c0_20] : memref<8x256xf32, #tpu.memory_space<vmem>>, vector<8x256xf32>
    %c2 = arith.constant 2 : index
    %c0_21 = arith.constant 0 : index
    %c0_22 = arith.constant 0 : index
    %20 = vector.load %arg2[%c2, %c0_21, %c0_22] : memref<9x8x4xf32, #tpu.memory_space<vmem>>, vector<1x8x4xf32>
    %21 = vector.shape_cast %20 : vector<1x8x4xf32> to vector<8x4xf32>
    %cst_23 = arith.constant dense<0.000000e+00> : vector<8x256xf32>
    %22 = tpu.matmul %21, %18, %cst_23 {dimension_numbers = #tpu.dot_dimension_numbers<[1], [0], [0], [1], [0, 0, 1, 1], [], []>} : vector<8x4xf32>, vector<4x256xf32>, vector<8x256xf32> -> vector<8x256xf32>
    %23 = arith.addf %19, %22 : vector<8x256xf32>
    %c0_24 = arith.constant 0 : index
    %c0_25 = arith.constant 0 : index
    %24 = vector.load %arg5[%c0_24, %c0_25] : memref<8x256xf32, #tpu.memory_space<vmem>>, vector<8x256xf32>
    tpu.vector_store %arg5[%c0_24, %c0_25], %23 {strides = array<i32>} : memref<8x256xf32, #tpu.memory_space<vmem>>, vector<8x256xf32>,
    %c240_i32 = arith.constant 240 : i32
    %25 = tpu.dynamic_rotate %0 by %c240_i32 dim 1 : vector<4x256xf32>, i32 -> vector<4x256xf32>
    %c0_26 = arith.constant 0 : index
    %c0_27 = arith.constant 0 : index
    %26 = vector.load %arg5[%c0_26, %c0_27] : memref<8x256xf32, #tpu.memory_space<vmem>>, vector<8x256xf32>
    %c3 = arith.constant 3 : index
    %c0_28 = arith.constant 0 : index
    %c0_29 = arith.constant 0 : index
    %27 = vector.load %arg2[%c3, %c0_28, %c0_29] : memref<9x8x4xf32, #tpu.memory_space<vmem>>, vector<1x8x4xf32>
    %28 = vector.shape_cast %27 : vector<1x8x4xf32> to vector<8x4xf32>
    %cst_30 = arith.constant dense<0.000000e+00> : vector<8x256xf32>
    %29 = tpu.matmul %28, %25, %cst_30 {dimension_numbers = #tpu.dot_dimension_numbers<[1], [0], [0], [1], [0, 0, 1, 1], [], []>} : vector<8x4xf32>, vector<4x256xf32>, vector<8x256xf32> -> vector<8x256xf32>
    %30 = arith.addf %26, %29 : vector<8x256xf32>
    %c0_31 = arith.constant 0 : index
    %c0_32 = arith.constant 0 : index
    %31 = vector.load %arg5[%c0_31, %c0_32] : memref<8x256xf32, #tpu.memory_space<vmem>>, vector<8x256xf32>
    tpu.vector_store %arg5[%c0_31, %c0_32], %30 {strides = array<i32>} : memref<8x256xf32, #tpu.memory_space<vmem>>, vector<8x256xf32>,
    %c239_i32 = arith.constant 239 : i32
    %32 = tpu.dynamic_rotate %0 by %c239_i32 dim 1 : vector<4x256xf32>, i32 -> vector<4x256xf32>
    %c0_33 = arith.constant 0 : index
    %c0_34 = arith.constant 0 : index
    %33 = vector.load %arg5[%c0_33, %c0_34] : memref<8x256xf32, #tpu.memory_space<vmem>>, vector<8x256xf32>
    %c4 = arith.constant 4 : index
    %c0_35 = arith.constant 0 : index
    %c0_36 = arith.constant 0 : index
    %34 = vector.load %arg2[%c4, %c0_35, %c0_36] : memref<9x8x4xf32, #tpu.memory_space<vmem>>, vector<1x8x4xf32>
    %35 = vector.shape_cast %34 : vector<1x8x4xf32> to vector<8x4xf32>
    %cst_37 = arith.constant dense<0.000000e+00> : vector<8x256xf32>
    %36 = tpu.matmul %35, %32, %cst_37 {dimension_numbers = #tpu.dot_dimension_numbers<[1], [0], [0], [1], [0, 0, 1, 1], [], []>} : vector<8x4xf32>, vector<4x256xf32>, vector<8x256xf32> -> vector<8x256xf32>
    %37 = arith.addf %33, %36 : vector<8x256xf32>
    %c0_38 = arith.constant 0 : index
    %c0_39 = arith.constant 0 : index
    %38 = vector.load %arg5[%c0_38, %c0_39] : memref<8x256xf32, #tpu.memory_space<vmem>>, vector<8x256xf32>
    tpu.vector_store %arg5[%c0_38, %c0_39], %37 {strides = array<i32>} : memref<8x256xf32, #tpu.memory_space<vmem>>, vector<8x256xf32>,
    %c238_i32 = arith.constant 238 : i32
    %39 = tpu.dynamic_rotate %0 by %c238_i32 dim 1 : vector<4x256xf32>, i32 -> vector<4x256xf32>
    %c0_40 = arith.constant 0 : index
    %c0_41 = arith.constant 0 : index
    %40 = vector.load %arg5[%c0_40, %c0_41] : memref<8x256xf32, #tpu.memory_space<vmem>>, vector<8x256xf32>
    %c5 = arith.constant 5 : index
    %c0_42 = arith.constant 0 : index
    %c0_43 = arith.constant 0 : index
    %41 = vector.load %arg2[%c5, %c0_42, %c0_43] : memref<9x8x4xf32, #tpu.memory_space<vmem>>, vector<1x8x4xf32>
    %42 = vector.shape_cast %41 : vector<1x8x4xf32> to vector<8x4xf32>
    %cst_44 = arith.constant dense<0.000000e+00> : vector<8x256xf32>
    %43 = tpu.matmul %42, %39, %cst_44 {dimension_numbers = #tpu.dot_dimension_numbers<[1], [0], [0], [1], [0, 0, 1, 1], [], []>} : vector<8x4xf32>, vector<4x256xf32>, vector<8x256xf32> -> vector<8x256xf32>
    %44 = arith.addf %40, %43 : vector<8x256xf32>
    %c0_45 = arith.constant 0 : index
    %c0_46 = arith.constant 0 : index
    %45 = vector.load %arg5[%c0_45, %c0_46] : memref<8x256xf32, #tpu.memory_space<vmem>>, vector<8x256xf32>
    tpu.vector_store %arg5[%c0_45, %c0_46], %44 {strides = array<i32>} : memref<8x256xf32, #tpu.memory_space<vmem>>, vector<8x256xf32>,
    %c224_i32 = arith.constant 224 : i32
    %46 = tpu.dynamic_rotate %0 by %c224_i32 dim 1 : vector<4x256xf32>, i32 -> vector<4x256xf32>
    %c0_47 = arith.constant 0 : index
    %c0_48 = arith.constant 0 : index
    %47 = vector.load %arg5[%c0_47, %c0_48] : memref<8x256xf32, #tpu.memory_space<vmem>>, vector<8x256xf32>
    %c6 = arith.constant 6 : index
    %c0_49 = arith.constant 0 : index
    %c0_50 = arith.constant 0 : index
    %48 = vector.load %arg2[%c6, %c0_49, %c0_50] : memref<9x8x4xf32, #tpu.memory_space<vmem>>, vector<1x8x4xf32>
    %49 = vector.shape_cast %48 : vector<1x8x4xf32> to vector<8x4xf32>
    %cst_51 = arith.constant dense<0.000000e+00> : vector<8x256xf32>
    %50 = tpu.matmul %49, %46, %cst_51 {dimension_numbers = #tpu.dot_dimension_numbers<[1], [0], [0], [1], [0, 0, 1, 1], [], []>} : vector<8x4xf32>, vector<4x256xf32>, vector<8x256xf32> -> vector<8x256xf32>
    %51 = arith.addf %47, %50 : vector<8x256xf32>
    %c0_52 = arith.constant 0 : index
    %c0_53 = arith.constant 0 : index
    %52 = vector.load %arg5[%c0_52, %c0_53] : memref<8x256xf32, #tpu.memory_space<vmem>>, vector<8x256xf32>
    tpu.vector_store %arg5[%c0_52, %c0_53], %51 {strides = array<i32>} : memref<8x256xf32, #tpu.memory_space<vmem>>, vector<8x256xf32>,
    %c223_i32 = arith.constant 223 : i32
    %53 = tpu.dynamic_rotate %0 by %c223_i32 dim 1 : vector<4x256xf32>, i32 -> vector<4x256xf32>
    %c0_54 = arith.constant 0 : index
    %c0_55 = arith.constant 0 : index
    %54 = vector.load %arg5[%c0_54, %c0_55] : memref<8x256xf32, #tpu.memory_space<vmem>>, vector<8x256xf32>
    %c7 = arith.constant 7 : index
    %c0_56 = arith.constant 0 : index
    %c0_57 = arith.constant 0 : index
    %55 = vector.load %arg2[%c7, %c0_56, %c0_57] : memref<9x8x4xf32, #tpu.memory_space<vmem>>, vector<1x8x4xf32>
    %56 = vector.shape_cast %55 : vector<1x8x4xf32> to vector<8x4xf32>
    %cst_58 = arith.constant dense<0.000000e+00> : vector<8x256xf32>
    %57 = tpu.matmul %56, %53, %cst_58 {dimension_numbers = #tpu.dot_dimension_numbers<[1], [0], [0], [1], [0, 0, 1, 1], [], []>} : vector<8x4xf32>, vector<4x256xf32>, vector<8x256xf32> -> vector<8x256xf32>
    %58 = arith.addf %54, %57 : vector<8x256xf32>
    %c0_59 = arith.constant 0 : index
    %c0_60 = arith.constant 0 : index
    %59 = vector.load %arg5[%c0_59, %c0_60] : memref<8x256xf32, #tpu.memory_space<vmem>>, vector<8x256xf32>
    tpu.vector_store %arg5[%c0_59, %c0_60], %58 {strides = array<i32>} : memref<8x256xf32, #tpu.memory_space<vmem>>, vector<8x256xf32>,
    %c222_i32 = arith.constant 222 : i32
    %60 = tpu.dynamic_rotate %0 by %c222_i32 dim 1 : vector<4x256xf32>, i32 -> vector<4x256xf32>
    %c0_61 = arith.constant 0 : index
    %c0_62 = arith.constant 0 : index
    %61 = vector.load %arg5[%c0_61, %c0_62] : memref<8x256xf32, #tpu.memory_space<vmem>>, vector<8x256xf32>
    %c8 = arith.constant 8 : index
    %c0_63 = arith.constant 0 : index
    %c0_64 = arith.constant 0 : index
    %62 = vector.load %arg2[%c8, %c0_63, %c0_64] : memref<9x8x4xf32, #tpu.memory_space<vmem>>, vector<1x8x4xf32>
    %63 = vector.shape_cast %62 : vector<1x8x4xf32> to vector<8x4xf32>
    %cst_65 = arith.constant dense<0.000000e+00> : vector<8x256xf32>
    %64 = tpu.matmul %63, %60, %cst_65 {dimension_numbers = #tpu.dot_dimension_numbers<[1], [0], [0], [1], [0, 0, 1, 1], [], []>} : vector<8x4xf32>, vector<4x256xf32>, vector<8x256xf32> -> vector<8x256xf32>
    %65 = arith.addf %61, %64 : vector<8x256xf32>
    %c0_66 = arith.constant 0 : index
    %c0_67 = arith.constant 0 : index
    %66 = vector.load %arg5[%c0_66, %c0_67] : memref<8x256xf32, #tpu.memory_space<vmem>>, vector<8x256xf32>
    tpu.vector_store %arg5[%c0_66, %c0_67], %65 {strides = array<i32>} : memref<8x256xf32, #tpu.memory_space<vmem>>, vector<8x256xf32>,
    %c0_68 = arith.constant 0 : index
    %c0_69 = arith.constant 0 : index
    %67 = vector.load %arg5[%c0_68, %c0_69] : memref<8x256xf32, #tpu.memory_space<vmem>>, vector<8x256xf32>
    %c0_70 = arith.constant 0 : index
    %c0_71 = arith.constant 0 : index
    %68 = vector.load %arg4[%c0_70, %c0_71] : memref<8x256xf32, #tpu.memory_space<vmem>>, vector<8x256xf32>
    tpu.vector_store %arg4[%c0_70, %c0_71], %67 {strides = array<i32>} : memref<8x256xf32, #tpu.memory_space<vmem>>, vector<8x256xf32>,
    return
  }
  func.func @transform_0(%arg0: i32) -> (i32, i32) {
    %c0_i32 = arith.constant 0 : i32
    %c0_i32_0 = arith.constant 0 : i32
    return %c0_i32, %arg0 : i32, i32
  }
  func.func @transform_1(%arg0: i32) -> (i32, i32, i32) {
    %c0_i32 = arith.constant 0 : i32
    %c0_i32_0 = arith.constant 0 : i32
    %c0_i32_1 = arith.constant 0 : i32
    %c0_i32_2 = arith.constant 0 : i32
    return %c0_i32, %c0_i32_0, %c0_i32_1 : i32, i32, i32
  }
  func.func @transform_2(%arg0: i32) -> (i32, i32) {
    %c0_i32 = arith.constant 0 : i32
    %c0_i32_0 = arith.constant 0 : i32
    %c0_i32_1 = arith.constant 0 : i32
    return %c0_i32, %c0_i32_0 : i32, i32
  }
  func.func @transform_3(%arg0: i32) -> (i32, i32) {
    %c0_i32 = arith.constant 0 : i32
    %c0_i32_0 = arith.constant 0 : i32
    return %c0_i32, %arg0 : i32, i32
  }
}

</mosaic_0001>

<llo_original>
// kernel: tpu_custom_call.1
$region0: #{tpu_custom_call.1}
  #allocation0 [shape = 'u32[]', space=smem, size = 0x4, offset = 0x4, fixed_abs, tag = 'smem constant byte address 0x4 - core index']
  #allocation1 [shape = 'u32[72,128]{1,0:T(1,128)}', space=vmem, size = 0x9000, scoped, tag = 'internal scratch']
  #allocation2 [shape = 'f32[8,256]{1,0:T(8,128)}', space=vmem, size = 0x2000, scoped, tag = 'scratch operand']
  %s0 = inlined_call_operand.vmem [shape: f32[4,512], index: 0, kind: input, shape index: {}]
  %s1 = inlined_call_operand.vmem [shape: f32[9,8,4], index: 1, kind: input, shape index: {}]
  %s2 = inlined_call_operand.vmem [shape: f32[8,1], index: 2, kind: input, shape index: {}]
  %s3 = inlined_call_operand.hbm [shape: f32[8,512], index: 3, kind: output, shape index: {}]
  %s4 = sld [smem:[#allocation0]]
  $region45: #{tpu_custom_call.1} parent=0
    _
  %s6 = ssub.s32 1, %s4
  %s7 = scalar_select 0, %s6, %s4
  $region1: #{tpu_custom_call.1} parent=0
    #allocation3 [shape = 'u8[16384]{0}', space=vmem, size = 0x4000, scoped, tag = 'output window, operand 0']
    #allocation4 [shape = 's32[2]{0}', space=sflag, size = 0x8, scoped, tag = 'scoped memory for tpu_custom_call.1']
    %8 = vsyncpa [#allocation4], 0
    %s9 = scalar_lea.sflag [#allocation4], 1
    %10 = vsyncpa %s9, 0
    loop: start=0, step=1, limit=4
    $region2: #{tpu_custom_call.1} parent=1 // loop_pre_header
      _
    $region3: #{tpu_custom_call.1} parent=1 // loop_header
      %s12 = sphi 0, %s16
      %p13 = scmp.ge.s32.totalorder %s12, 4
      %s22 = sphi 0, %s24
      %s25 = sphi 0, %s22
      %s26 = sphi 0, %s25
      %s42 = sphi 0, %s26
      %s46 = sphi 0, %s46
      %s48 = sphi 0, %s46
      %s49 = sphi 0, %s48
      %s63 = sphi 0, %s49
      %s67 = sphi 0, %s67
      %s69 = sphi 0, %s67
      %s70 = sphi 0, %s69
      %s84 = sphi 0, %s70
      %s90 = sphi 0, %s92
      %s93 = sphi 0, %s90
      %s94 = sphi 0, %s93
      %s110 = sphi 0, %s94
    $region4: #{tpu_custom_call.1} parent=1 // loop_header_branch
      %15 = sbr.rel (%p13) target = $region8
    $region5: #{tpu_custom_call.1} parent=1 // loop_body
      %s17 = ssub.s32 %s12, 1
      %s18 = ssub.s32 %s12, 2
      %s19 = sadd.s32 %s12, 1
      %s20 = ssub.s32 %s12, %s19
      %p21 = scmp.eq.s32.totalorder %s20, 0
      %s23 = sadd.s32 %s22, 1
      %s24 = scalar_select %p21, %s22, %s23
      %p27 = pneg %p21
      %p28 = scmp.eq.s32.totalorder %s12, 1
      %p29 = por %p27, %p28
      %p30 = scmp.ne.s32.totalorder %s22, %s25
      %p31 = scmp.eq.s32.totalorder %s12, 0
      %p32 = por %p30, %p31
      %p33 = scmp.ne.s32.totalorder %s22, %s25
      %p34 = scmp.eq.s32.totalorder %s17, 1
      %p35 = por %p33, %p34
      %p36 = scmp.ne.s32.totalorder %s25, %s26
      %p37 = scmp.eq.s32.totalorder %s17, 0
      %p38 = por %p36, %p37
      %p39 = scmp.ne.s32.totalorder %s25, %s26
      %p40 = scmp.eq.s32.totalorder %s18, 1
      %p41 = por %p39, %p40
      %p43 = scmp.ne.s32.totalorder %s26, %s42
      %p44 = scmp.eq.s32.totalorder %s18, 0
      %p45 = por %p43, %p44
      %s47 = sadd.s32 %s46, 1
      %p50 = scmp.eq.s32.totalorder %s12, 1
      %p51 = scmp.ne.s32.totalorder %s46, %s48
      %p52 = scmp.eq.s32.totalorder %s12, 0
      %p53 = por %p51, %p52
      %p54 = scmp.ne.s32.totalorder %s46, %s48
      %p55 = scmp.eq.s32.totalorder %s17, 1
      %p56 = por %p54, %p55
      %p57 = scmp.ne.s32.totalorder %s48, %s49
      %p58 = scmp.eq.s32.totalorder %s17, 0
      %p59 = por %p57, %p58
      %p60 = scmp.ne.s32.totalorder %s48, %s49
      %p61 = scmp.eq.s32.totalorder %s18, 1
      %p62 = por %p60, %p61
      %p64 = scmp.ne.s32.totalorder %s49, %s63
      %p65 = scmp.eq.s32.totalorder %s18, 0
      %p66 = por %p64, %p65
      %s68 = sadd.s32 %s67, 1
      %p71 = scmp.eq.s32.totalorder %s12, 1
      %p72 = scmp.ne.s32.totalorder %s67, %s69
      %p73 = scmp.eq.s32.totalorder %s12, 0
      %p74 = por %p72, %p73
      %p75 = scmp.ne.s32.totalorder %s67, %s69
      %p76 = scmp.eq.s32.totalorder %s17, 1
      %p77 = por %p75, %p76
      %p78 = scmp.ne.s32.totalorder %s69, %s70
      %p79 = scmp.eq.s32.totalorder %s17, 0
      %p80 = por %p78, %p79
      %p81 = scmp.ne.s32.totalorder %s69, %s70
      %p82 = scmp.eq.s32.totalorder %s18, 1
      %p83 = por %p81, %p82
      %p85 = scmp.ne.s32.totalorder %s70, %s84
      %p86 = scmp.eq.s32.totalorder %s18, 0
      %p87 = por %p85, %p86
      %s88 = ssub.s32 %s12, %s19
      %p89 = scmp.eq.s32.totalorder %s88, 0
      %s91 = sadd.s32 %s90, 1
      %s92 = scalar_select %p89, %s90, %s91
      %p95 = pneg %p89
      %p96 = scmp.eq.s32.totalorder %s12, 1
      %p97 = por %p95, %p96
      %p98 = scmp.ne.s32.totalorder %s90, %s93
      %p99 = scmp.eq.s32.totalorder %s12, 0
      %p100 = por %p98, %p99
      %p101 = scmp.ne.s32.totalorder %s90, %s93
      %p102 = scmp.eq.s32.totalorder %s17, 1
      %p103 = por %p101, %p102
      %p104 = scmp.ne.s32.totalorder %s93, %s94
      %p105 = scmp.eq.s32.totalorder %s17, 0
      %p106 = por %p104, %p105
      %p107 = scmp.ne.s32.totalorder %s93, %s94
      %p108 = scmp.eq.s32.totalorder %s18, 1
      %p109 = por %p107, %p108
      %p111 = scmp.ne.s32.totalorder %s94, %s110
      %p112 = scmp.eq.s32.totalorder %s18, 0
      %p113 = por %p111, %p112
      %p114 = scmp.le.s32.totalorder 1, %s12
      %p115 = scmp.lt.s32.totalorder %s12, 3
      %p116 = pnand %p114, %p115
      %p117 = pneg %p116
      // Predicated region
      $region9: #{tpu_custom_call.1} parent=5 // pred_check
        _
      $region10: #{tpu_custom_call.1} parent=5 // pred_check_branch
        %119 = sbr.rel (%p116) target = $region12
      $region11: #{tpu_custom_call.1} parent=5 // pred_region
        %s120 = ssub.s32 %s12, 1
        // Predicated region
        $region13: #{tpu_custom_call.1} parent=11 // pred_check
          %p121 = pneg %p59
        $region14: #{tpu_custom_call.1} parent=11 // pred_check_branch
          %123 = sbr.rel (%p121) target = $region16
        $region15: #{tpu_custom_call.1} parent=11 // pred_region
          _
        $region16: #{tpu_custom_call.1} parent=11 // pred_fallthru
          _
        // Predicated region
        $region17: #{tpu_custom_call.1} parent=11 // pred_check
          %p124 = pneg %p80
        $region18: #{tpu_custom_call.1} parent=11 // pred_check_branch
          %126 = sbr.rel (%p124) target = $region20
        $region19: #{tpu_custom_call.1} parent=11 // pred_region
          _
        $region20: #{tpu_custom_call.1} parent=11 // pred_fallthru
          _
      $region12: #{tpu_custom_call.1} parent=5 // pred_fallthru
        _
      %p127 = scmp.lt.s32.totalorder %s12, 2
      // Predicated region
      $region21: #{tpu_custom_call.1} parent=5 // pred_check
        %p128 = pneg %p127
      $region22: #{tpu_custom_call.1} parent=5 // pred_check_branch
        %130 = sbr.rel (%p128) target = $region24
      $region23: #{tpu_custom_call.1} parent=5 // pred_region
        // Predicated region
        $region25: #{tpu_custom_call.1} parent=23 // pred_check
          %p131 = pneg %p32
        $region26: #{tpu_custom_call.1} parent=23 // pred_check_branch
          %133 = sbr.rel (%p131) target = $region28
        $region27: #{tpu_custom_call.1} parent=23 // pred_region
          %s134 = smul.u32 2, %s12
          %p135 = scmp.lt.s32.totalorder %s134, 3
          %s136 = scalar_select %p135, %s134, 3
          %s137 = smul.addr %s136, 4
          %s138 = scalar_lea.vmem %s0, %s137
          %s139 = smul.u32 2, %s12
        $region28: #{tpu_custom_call.1} parent=23 // pred_fallthru
          _
      $region24: #{tpu_custom_call.1} parent=5 // pred_fallthru
        _
      %p140 = scmp.le.s32.totalorder 1, %s12
      %p141 = scmp.lt.s32.totalorder %s12, 3
      %p142 = pnand %p140, %p141
      %p143 = pneg %p142
      // Predicated region
      $region29: #{tpu_custom_call.1} parent=5 // pred_check
        _
      $region30: #{tpu_custom_call.1} parent=5 // pred_check_branch
        %145 = sbr.rel (%p142) target = $region32
      $region31: #{tpu_custom_call.1} parent=5 // pred_region
        %s146 = ssub.s32 %s12, 1
        %s147 = smul.u32 2, %s17
        %p148 = scmp.lt.s32.totalorder %s147, 3
        %s149 = scalar_select %p148, %s147, 3
        %s150 = smul.addr %s149, 4
        %s151 = scalar_lea.vmem %s0, %s150
        %p152 = pneg %p38
        %p153 = pneg %p35
        %p154 = pneg %p59
        %p155 = pneg %p56
        %p156 = pneg %p80
        %p157 = pneg %p77
        %p158 = pneg %p106
        %p159 = pneg %p103
        %s160 = sand.u32 %s93, 1
        %s161 = scalar_lea.sflag [#allocation4], %s160
        %s162 = sand.u32 %s93, 1
        %s163 = smul.addr %s162, 16
        %s164 = scalar_lea.vmem [#allocation3], %s163
        %s165 = smul.u32 2, %s17
        %p166 = scmp.lt.s32.totalorder %s165, 3
        %s167 = scalar_select %p166, %s165, 3
        %s168 = smul.addr %s167, 4
        %s169 = scalar_lea.vmem %s0, %s168
        %s170 = smul.u32 2, %s17
        %s171 = smul.u32 2, %s17
        %v172 = vld [vmem:[%s169] sm:$0xff]
        %v173 = vld [vmem:[%s2] sm:$0xff]
        %175 = vset.pattern.permute.xlu0 0
        %176 = vperm.xlu0 %175, %v173
        %v177 = vpop.permute.xlu0 %176
        %179 = vst [vmem:[#allocation2] sm:$0xff] %v177
        %180 = vst [vmem:[#allocation2 + $0x8] sm:$0xff] %v177
        %v181 = vld [vmem:[#allocation2] sm:$0xff]
        %v182 = vld [vmem:[#allocation2 + $0x8] sm:$0xff]
        %v183 = vld [vmem:[%s1] sm:$0xff]
        %185 = vst [vmem:[#allocation1] ss:$2 sm:$0xff] %v172
        %v186 = vld.sshfl [vmem:[#allocation1] sm:$0xff pattern:$0x75316420]
        %v187 = vld.sshfl [vmem:[#allocation1 + $0x8] sm:$0xff pattern:$0x75316420]
        %vm188 = vcmask 31744
        %v190 = vsel %vm188, %v183, 0
        %vm192 = vcmask 1043456
        %v193 = vsel %vm192, %v186, 0
        %v195 = vsel %vm192, %v187, 0
        %197 = vmatpush.msra.mxu0 0.0
        %198 = vmatpush.msra.mxu0 0.0
        %199 = vmatpush.msra.mxu0 0.0
        %200 = vmatpush.msra.mxu0 0.0
        %201 = vmatpush.msra.mxu0 0.0
        %202 = vmatpush.msra.mxu0 0.0
        %203 = vmatpush.msra.mxu0 0.0
        %204 = vmatpush.msra.mxu0 0.0
        %205 = vmatpush.msra.mxu0 0.0
        %206 = vmatpush.msra.mxu0 0.0
        %207 = vmatpush.msra.mxu0 0.0
        %208 = vmatpush.msra.mxu0 0.0
        %209 = vmatpush.msra.mxu0 0.0
        %210 = vmatpush.msra.mxu0 0.0
        %211 = vmatpush.msra.mxu0 0.0
        %212 = vmatpush.msra.mxu0 %v193
        %213 = vmatmul.f32.gmra.mxu0 %v190
        %v214 = vpop.f32.mrf.mxu0
        %v215 = vadd.f32 0.0, %v214
        %216 = vdwg.mxu0
        %217 = vmatpush.msra.mxu0 0.0
        %218 = vmatpush.msra.mxu0 0.0
        %219 = vmatpush.msra.mxu0 0.0
        %220 = vmatpush.msra.mxu0 0.0
        %221 = vmatpush.msra.mxu0 0.0
        %222 = vmatpush.msra.mxu0 0.0
        %223 = vmatpush.msra.mxu0 0.0
        %224 = vmatpush.msra.mxu0 0.0
        %225 = vmatpush.msra.mxu0 0.0
        %226 = vmatpush.msra.mxu0 0.0
        %227 = vmatpush.msra.mxu0 0.0
        %228 = vmatpush.msra.mxu0 0.0
        %229 = vmatpush.msra.mxu0 0.0
        %230 = vmatpush.msra.mxu0 0.0
        %231 = vmatpush.msra.mxu0 0.0
        %232 = vmatpush.msra.mxu0 %v195
        %233 = vmatmul.f32.gmra.mxu0 %v190
        %v234 = vpop.f32.mrf.mxu0
        %v235 = vadd.f32 0.0, %v234
        %236 = vdwg.mxu0
        %v237 = vadd.f32 %v181, %v215
        %v238 = vadd.f32 %v182, %v235
        %239 = vst [vmem:[#allocation2] sm:$0xff] %v237
        %240 = vst [vmem:[#allocation2 + $0x8] sm:$0xff] %v238
        %241 = vst [vmem:[#allocation1] ss:$2 sm:$0xff] %v172
        %v242 = vld.sshfl [vmem:[#allocation1] sm:$0xff pattern:$0x75316420]
        %v243 = vld.sshfl [vmem:[#allocation1 + $0x8] sm:$0xff pattern:$0x75316420]
        %246 = vrot.lane.b32.xlu0 %v242, 127
        %v247 = vpop.permute.xlu0 %246
        %248 = vrot.lane.b32.xlu0 %v243, 127
        %v249 = vpop.permute.xlu0 %248
        %v250 = vlaneseq
        %v251 = vand.u32 %v250, 127
        %vm252 = vcmp.lt.s32.totalorder %v251, 127
        %v253 = vsel %vm252, %v247, %v249
        %v254 = vsel %vm252, %v249, %v247
        %v255 = vld [vmem:[#allocation2] sm:$0xff]
        %v256 = vld [vmem:[#allocation2 + $0x8] sm:$0xff]
        %s257 = scalar_lea.vmem %s1, 8
        %v258 = vld [vmem:[%s257] sm:$0xff]
        %v260 = vsel %vm188, %v258, 0
        %v263 = vsel %vm192, %v253, 0
        %v266 = vsel %vm192, %v254, 0
        %268 = vmatpush.msra.mxu0 0.0
        %269 = vmatpush.msra.mxu0 0.0
        %270 = vmatpush.msra.mxu0 0.0
        %271 = vmatpush.msra.mxu0 0.0
        %272 = vmatpush.msra.mxu0 0.0
        %273 = vmatpush.msra.mxu0 0.0
        %274 = vmatpush.msra.mxu0 0.0
        %275 = vmatpush.msra.mxu0 0.0
        %276 = vmatpush.msra.mxu0 0.0
        %277 = vmatpush.msra.mxu0 0.0
        %278 = vmatpush.msra.mxu0 0.0
        %279 = vmatpush.msra.mxu0 0.0
        %280 = vmatpush.msra.mxu0 0.0
        %281 = vmatpush.msra.mxu0 0.0
        %282 = vmatpush.msra.mxu0 0.0
        %283 = vmatpush.msra.mxu0 %v263
        %284 = vmatmul.f32.gmra.mxu0 %v260
        %v285 = vpop.f32.mrf.mxu0
        %v286 = vadd.f32 0.0, %v285
        %287 = vdwg.mxu0
        %288 = vmatpush.msra.mxu0 0.0
        %289 = vmatpush.msra.mxu0 0.0
        %290 = vmatpush.msra.mxu0 0.0
        %291 = vmatpush.msra.mxu0 0.0
        %292 = vmatpush.msra.mxu0 0.0
        %293 = vmatpush.msra.mxu0 0.0
        %294 = vmatpush.msra.mxu0 0.0
        %295 = vmatpush.msra.mxu0 0.0
        %296 = vmatpush.msra.mxu0 0.0
        %297 = vmatpush.msra.mxu0 0.0
        %298 = vmatpush.msra.mxu0 0.0
        %299 = vmatpush.msra.mxu0 0.0
        %300 = vmatpush.msra.mxu0 0.0
        %301 = vmatpush.msra.mxu0 0.0
        %302 = vmatpush.msra.mxu0 0.0
        %303 = vmatpush.msra.mxu0 %v266
        %304 = vmatmul.f32.gmra.mxu0 %v260
        %v305 = vpop.f32.mrf.mxu0
        %v306 = vadd.f32 0.0, %v305
        %307 = vdwg.mxu0
        %v308 = vadd.f32 %v255, %v286
        %v309 = vadd.f32 %v256, %v306
        %310 = vst [vmem:[#allocation2] sm:$0xff] %v308
        %311 = vst [vmem:[#allocation2 + $0x8] sm:$0xff] %v309
        %312 = vst [vmem:[#allocation1] ss:$2 sm:$0xff] %v172
        %v313 = vld.sshfl [vmem:[#allocation1] sm:$0xff pattern:$0x75316420]
        %v314 = vld.sshfl [vmem:[#allocation1 + $0x8] sm:$0xff pattern:$0x75316420]
        %317 = vrot.lane.b32.xlu0 %v313, 126
        %v318 = vpop.permute.xlu0 %317
        %319 = vrot.lane.b32.xlu0 %v314, 126
        %v320 = vpop.permute.xlu0 %319
        %vm321 = vcmp.lt.s32.totalorder %v251, 126
        %v322 = vsel %vm321, %v318, %v320
        %v323 = vsel %vm321, %v320, %v318
        %v324 = vld [vmem:[#allocation2] sm:$0xff]
        %v325 = vld [vmem:[#allocation2 + $0x8] sm:$0xff]
        %s326 = scalar_lea.vmem %s1, 16
        %v327 = vld [vmem:[%s326] sm:$0xff]
        %v329 = vsel %vm188, %v327, 0
        %v332 = vsel %vm192, %v322, 0
        %v335 = vsel %vm192, %v323, 0
        %337 = vmatpush.msra.mxu0 0.0
        %338 = vmatpush.msra.mxu0 0.0
        %339 = vmatpush.msra.mxu0 0.0
        %340 = vmatpush.msra.mxu0 0.0
        %341 = vmatpush.msra.mxu0 0.0
        %342 = vmatpush.msra.mxu0 0.0
        %343 = vmatpush.msra.mxu0 0.0
        %344 = vmatpush.msra.mxu0 0.0
        %345 = vmatpush.msra.mxu0 0.0
        %346 = vmatpush.msra.mxu0 0.0
        %347 = vmatpush.msra.mxu0 0.0
        %348 = vmatpush.msra.mxu0 0.0
        %349 = vmatpush.msra.mxu0 0.0
        %350 = vmatpush.msra.mxu0 0.0
        %351 = vmatpush.msra.mxu0 0.0
        %352 = vmatpush.msra.mxu0 %v332
        %353 = vmatmul.f32.gmra.mxu0 %v329
        %v354 = vpop.f32.mrf.mxu0
        %v355 = vadd.f32 0.0, %v354
        %356 = vdwg.mxu0
        %357 = vmatpush.msra.mxu0 0.0
        %358 = vmatpush.msra.mxu0 0.0
        %359 = vmatpush.msra.mxu0 0.0
        %360 = vmatpush.msra.mxu0 0.0
        %361 = vmatpush.msra.mxu0 0.0
        %362 = vmatpush.msra.mxu0 0.0
        %363 = vmatpush.msra.mxu0 0.0
        %364 = vmatpush.msra.mxu0 0.0
        %365 = vmatpush.msra.mxu0 0.0
        %366 = vmatpush.msra.mxu0 0.0
        %367 = vmatpush.msra.mxu0 0.0
        %368 = vmatpush.msra.mxu0 0.0
        %369 = vmatpush.msra.mxu0 0.0
        %370 = vmatpush.msra.mxu0 0.0
        %371 = vmatpush.msra.mxu0 0.0
        %372 = vmatpush.msra.mxu0 %v335
        %373 = vmatmul.f32.gmra.mxu0 %v329
        %v374 = vpop.f32.mrf.mxu0
        %v375 = vadd.f32 0.0, %v374
        %376 = vdwg.mxu0
        %v377 = vadd.f32 %v324, %v355
        %v378 = vadd.f32 %v325, %v375
        %379 = vst [vmem:[#allocation2] sm:$0xff] %v377
        %380 = vst [vmem:[#allocation2 + $0x8] sm:$0xff] %v378
        %381 = vst [vmem:[#allocation1] ss:$2 sm:$0xff] %v172
        %v382 = vld.sshfl [vmem:[#allocation1] sm:$0xff pattern:$0x75316420]
        %v383 = vld.sshfl [vmem:[#allocation1 + $0x8] sm:$0xff pattern:$0x75316420]
        %386 = vrot.lane.b32.xlu0 %v382, 112
        %v387 = vpop.permute.xlu0 %386
        %388 = vrot.lane.b32.xlu0 %v383, 112
        %v389 = vpop.permute.xlu0 %388
        %vm390 = vcmp.lt.s32.totalorder %v251, 112
        %v391 = vsel %vm390, %v387, %v389
        %v392 = vsel %vm390, %v389, %v387
        %v393 = vld [vmem:[#allocation2] sm:$0xff]
        %v394 = vld [vmem:[#allocation2 + $0x8] sm:$0xff]
        %s395 = scalar_lea.vmem %s1, 24
        %v396 = vld [vmem:[%s395] sm:$0xff]
        %v398 = vsel %vm188, %v396, 0
        %v401 = vsel %vm192, %v391, 0
        %v404 = vsel %vm192, %v392, 0
        %406 = vmatpush.msra.mxu0 0.0
        %407 = vmatpush.msra.mxu0 0.0
        %408 = vmatpush.msra.mxu0 0.0
        %409 = vmatpush.msra.mxu0 0.0
        %410 = vmatpush.msra.mxu0 0.0
        %411 = vmatpush.msra.mxu0 0.0
        %412 = vmatpush.msra.mxu0 0.0
        %413 = vmatpush.msra.mxu0 0.0
        %414 = vmatpush.msra.mxu0 0.0
        %415 = vmatpush.msra.mxu0 0.0
        %416 = vmatpush.msra.mxu0 0.0
        %417 = vmatpush.msra.mxu0 0.0
        %418 = vmatpush.msra.mxu0 0.0
        %419 = vmatpush.msra.mxu0 0.0
        %420 = vmatpush.msra.mxu0 0.0
        %421 = vmatpush.msra.mxu0 %v401
        %422 = vmatmul.f32.gmra.mxu0 %v398
        %v423 = vpop.f32.mrf.mxu0
        %v424 = vadd.f32 0.0, %v423
        %425 = vdwg.mxu0
        %426 = vmatpush.msra.mxu0 0.0
        %427 = vmatpush.msra.mxu0 0.0
        %428 = vmatpush.msra.mxu0 0.0
        %429 = vmatpush.msra.mxu0 0.0
        %430 = vmatpush.msra.mxu0 0.0
        %431 = vmatpush.msra.mxu0 0.0
        %432 = vmatpush.msra.mxu0 0.0
        %433 = vmatpush.msra.mxu0 0.0
        %434 = vmatpush.msra.mxu0 0.0
        %435 = vmatpush.msra.mxu0 0.0
        %436 = vmatpush.msra.mxu0 0.0
        %437 = vmatpush.msra.mxu0 0.0
        %438 = vmatpush.msra.mxu0 0.0
        %439 = vmatpush.msra.mxu0 0.0
        %440 = vmatpush.msra.mxu0 0.0
        %441 = vmatpush.msra.mxu0 %v404
        %442 = vmatmul.f32.gmra.mxu0 %v398
        %v443 = vpop.f32.mrf.mxu0
        %v444 = vadd.f32 0.0, %v443
        %445 = vdwg.mxu0
        %v446 = vadd.f32 %v393, %v424
        %v447 = vadd.f32 %v394, %v444
        %448 = vst [vmem:[#allocation2] sm:$0xff] %v446
        %449 = vst [vmem:[#allocation2 + $0x8] sm:$0xff] %v447
        %450 = vst [vmem:[#allocation1] ss:$2 sm:$0xff] %v172
        %v451 = vld.sshfl [vmem:[#allocation1] sm:$0xff pattern:$0x75316420]
        %v452 = vld.sshfl [vmem:[#allocation1 + $0x8] sm:$0xff pattern:$0x75316420]
        %455 = vrot.lane.b32.xlu0 %v451, 111
        %v456 = vpop.permute.xlu0 %455
        %457 = vrot.lane.b32.xlu0 %v452, 111
        %v458 = vpop.permute.xlu0 %457
        %vm459 = vcmp.lt.s32.totalorder %v251, 111
        %v460 = vsel %vm459, %v456, %v458
        %v461 = vsel %vm459, %v458, %v456
        %v462 = vld [vmem:[#allocation2] sm:$0xff]
        %v463 = vld [vmem:[#allocation2 + $0x8] sm:$0xff]
        %s464 = scalar_lea.vmem %s1, 32
        %v465 = vld [vmem:[%s464] sm:$0xff]
        %v467 = vsel %vm188, %v465, 0
        %v470 = vsel %vm192, %v460, 0
        %v473 = vsel %vm192, %v461, 0
        %475 = vmatpush.msra.mxu0 0.0
        %476 = vmatpush.msra.mxu0 0.0
        %477 = vmatpush.msra.mxu0 0.0
        %478 = vmatpush.msra.mxu0 0.0
        %479 = vmatpush.msra.mxu0 0.0
        %480 = vmatpush.msra.mxu0 0.0
        %481 = vmatpush.msra.mxu0 0.0
        %482 = vmatpush.msra.mxu0 0.0
        %483 = vmatpush.msra.mxu0 0.0
        %484 = vmatpush.msra.mxu0 0.0
        %485 = vmatpush.msra.mxu0 0.0
        %486 = vmatpush.msra.mxu0 0.0
        %487 = vmatpush.msra.mxu0 0.0
        %488 = vmatpush.msra.mxu0 0.0
        %489 = vmatpush.msra.mxu0 0.0
        %490 = vmatpush.msra.mxu0 %v470
        %491 = vmatmul.f32.gmra.mxu0 %v467
        %v492 = vpop.f32.mrf.mxu0
        %v493 = vadd.f32 0.0, %v492
        %494 = vdwg.mxu0
        %495 = vmatpush.msra.mxu0 0.0
        %496 = vmatpush.msra.mxu0 0.0
        %497 = vmatpush.msra.mxu0 0.0
        %498 = vmatpush.msra.mxu0 0.0
        %499 = vmatpush.msra.mxu0 0.0
        %500 = vmatpush.msra.mxu0 0.0
        %501 = vmatpush.msra.mxu0 0.0
        %502 = vmatpush.msra.mxu0 0.0
        %503 = vmatpush.msra.mxu0 0.0
        %504 = vmatpush.msra.mxu0 0.0
        %505 = vmatpush.msra.mxu0 0.0
        %506 = vmatpush.msra.mxu0 0.0
        %507 = vmatpush.msra.mxu0 0.0
        %508 = vmatpush.msra.mxu0 0.0
        %509 = vmatpush.msra.mxu0 0.0
        %510 = vmatpush.msra.mxu0 %v473
        %511 = vmatmul.f32.gmra.mxu0 %v467
        %v512 = vpop.f32.mrf.mxu0
        %v513 = vadd.f32 0.0, %v512
        %514 = vdwg.mxu0
        %v515 = vadd.f32 %v462, %v493
        %v516 = vadd.f32 %v463, %v513
        %517 = vst [vmem:[#allocation2] sm:$0xff] %v515
        %518 = vst [vmem:[#allocation2 + $0x8] sm:$0xff] %v516
        %519 = vst [vmem:[#allocation1] ss:$2 sm:$0xff] %v172
        %v520 = vld.sshfl [vmem:[#allocation1] sm:$0xff pattern:$0x75316420]
        %v521 = vld.sshfl [vmem:[#allocation1 + $0x8] sm:$0xff pattern:$0x75316420]
        %524 = vrot.lane.b32.xlu0 %v520, 110
        %v525 = vpop.permute.xlu0 %524
        %526 = vrot.lane.b32.xlu0 %v521, 110
        %v527 = vpop.permute.xlu0 %526
        %vm528 = vcmp.lt.s32.totalorder %v251, 110
        %v529 = vsel %vm528, %v525, %v527
        %v530 = vsel %vm528, %v527, %v525
        %v531 = vld [vmem:[#allocation2] sm:$0xff]
        %v532 = vld [vmem:[#allocation2 + $0x8] sm:$0xff]
        %s533 = scalar_lea.vmem %s1, 40
        %v534 = vld [vmem:[%s533] sm:$0xff]
        %v536 = vsel %vm188, %v534, 0
        %v539 = vsel %vm192, %v529, 0
        %v542 = vsel %vm192, %v530, 0
        %544 = vmatpush.msra.mxu0 0.0
        %545 = vmatpush.msra.mxu0 0.0
        %546 = vmatpush.msra.mxu0 0.0
        %547 = vmatpush.msra.mxu0 0.0
        %548 = vmatpush.msra.mxu0 0.0
        %549 = vmatpush.msra.mxu0 0.0
        %550 = vmatpush.msra.mxu0 0.0
        %551 = vmatpush.msra.mxu0 0.0
        %552 = vmatpush.msra.mxu0 0.0
        %553 = vmatpush.msra.mxu0 0.0
        %554 = vmatpush.msra.mxu0 0.0
        %555 = vmatpush.msra.mxu0 0.0
        %556 = vmatpush.msra.mxu0 0.0
        %557 = vmatpush.msra.mxu0 0.0
        %558 = vmatpush.msra.mxu0 0.0
        %559 = vmatpush.msra.mxu0 %v539
        %560 = vmatmul.f32.gmra.mxu0 %v536
        %v561 = vpop.f32.mrf.mxu0
        %v562 = vadd.f32 0.0, %v561
        %563 = vdwg.mxu0
        %564 = vmatpush.msra.mxu0 0.0
        %565 = vmatpush.msra.mxu0 0.0
        %566 = vmatpush.msra.mxu0 0.0
        %567 = vmatpush.msra.mxu0 0.0
        %568 = vmatpush.msra.mxu0 0.0
        %569 = vmatpush.msra.mxu0 0.0
        %570 = vmatpush.msra.mxu0 0.0
        %571 = vmatpush.msra.mxu0 0.0
        %572 = vmatpush.msra.mxu0 0.0
        %573 = vmatpush.msra.mxu0 0.0
        %574 = vmatpush.msra.mxu0 0.0
        %575 = vmatpush.msra.mxu0 0.0
        %576 = vmatpush.msra.mxu0 0.0
        %577 = vmatpush.msra.mxu0 0.0
        %578 = vmatpush.msra.mxu0 0.0
        %579 = vmatpush.msra.mxu0 %v542
        %580 = vmatmul.f32.gmra.mxu0 %v536
        %v581 = vpop.f32.mrf.mxu0
        %v582 = vadd.f32 0.0, %v581
        %583 = vdwg.mxu0
        %v584 = vadd.f32 %v531, %v562
        %v585 = vadd.f32 %v532, %v582
        %586 = vst [vmem:[#allocation2] sm:$0xff] %v584
        %587 = vst [vmem:[#allocation2 + $0x8] sm:$0xff] %v585
        %588 = vst [vmem:[#allocation1] ss:$2 sm:$0xff] %v172
        %v589 = vld.sshfl [vmem:[#allocation1] sm:$0xff pattern:$0x75316420]
        %v590 = vld.sshfl [vmem:[#allocation1 + $0x8] sm:$0xff pattern:$0x75316420]
        %593 = vrot.lane.b32.xlu0 %v589, 96
        %v594 = vpop.permute.xlu0 %593
        %595 = vrot.lane.b32.xlu0 %v590, 96
        %v596 = vpop.permute.xlu0 %595
        %vm597 = vcmp.lt.s32.totalorder %v251, 96
        %v598 = vsel %vm597, %v594, %v596
        %v599 = vsel %vm597, %v596, %v594
        %v600 = vld [vmem:[#allocation2] sm:$0xff]
        %v601 = vld [vmem:[#allocation2 + $0x8] sm:$0xff]
        %s602 = scalar_lea.vmem %s1, 48
        %v603 = vld [vmem:[%s602] sm:$0xff]
        %v605 = vsel %vm188, %v603, 0
        %v608 = vsel %vm192, %v598, 0
        %v611 = vsel %vm192, %v599, 0
        %613 = vmatpush.msra.mxu0 0.0
        %614 = vmatpush.msra.mxu0 0.0
        %615 = vmatpush.msra.mxu0 0.0
        %616 = vmatpush.msra.mxu0 0.0
        %617 = vmatpush.msra.mxu0 0.0
        %618 = vmatpush.msra.mxu0 0.0
        %619 = vmatpush.msra.mxu0 0.0
        %620 = vmatpush.msra.mxu0 0.0
        %621 = vmatpush.msra.mxu0 0.0
        %622 = vmatpush.msra.mxu0 0.0
        %623 = vmatpush.msra.mxu0 0.0
        %624 = vmatpush.msra.mxu0 0.0
        %625 = vmatpush.msra.mxu0 0.0
        %626 = vmatpush.msra.mxu0 0.0
        %627 = vmatpush.msra.mxu0 0.0
        %628 = vmatpush.msra.mxu0 %v608
        %629 = vmatmul.f32.gmra.mxu0 %v605
        %v630 = vpop.f32.mrf.mxu0
        %v631 = vadd.f32 0.0, %v630
        %632 = vdwg.mxu0
        %633 = vmatpush.msra.mxu0 0.0
        %634 = vmatpush.msra.mxu0 0.0
        %635 = vmatpush.msra.mxu0 0.0
        %636 = vmatpush.msra.mxu0 0.0
        %637 = vmatpush.msra.mxu0 0.0
        %638 = vmatpush.msra.mxu0 0.0
        %639 = vmatpush.msra.mxu0 0.0
        %640 = vmatpush.msra.mxu0 0.0
        %641 = vmatpush.msra.mxu0 0.0
        %642 = vmatpush.msra.mxu0 0.0
        %643 = vmatpush.msra.mxu0 0.0
        %644 = vmatpush.msra.mxu0 0.0
        %645 = vmatpush.msra.mxu0 0.0
        %646 = vmatpush.msra.mxu0 0.0
        %647 = vmatpush.msra.mxu0 0.0
        %648 = vmatpush.msra.mxu0 %v611
        %649 = vmatmul.f32.gmra.mxu0 %v605
        %v650 = vpop.f32.mrf.mxu0
        %v651 = vadd.f32 0.0, %v650
        %652 = vdwg.mxu0
        %v653 = vadd.f32 %v600, %v631
        %v654 = vadd.f32 %v601, %v651
        %655 = vst [vmem:[#allocation2] sm:$0xff] %v653
        %656 = vst [vmem:[#allocation2 + $0x8] sm:$0xff] %v654
        %657 = vst [vmem:[#allocation1] ss:$2 sm:$0xff] %v172
        %v658 = vld.sshfl [vmem:[#allocation1] sm:$0xff pattern:$0x75316420]
        %v659 = vld.sshfl [vmem:[#allocation1 + $0x8] sm:$0xff pattern:$0x75316420]
        %662 = vrot.lane.b32.xlu0 %v658, 95
        %v663 = vpop.permute.xlu0 %662
        %664 = vrot.lane.b32.xlu0 %v659, 95
        %v665 = vpop.permute.xlu0 %664
        %vm666 = vcmp.lt.s32.totalorder %v251, 95
        %v667 = vsel %vm666, %v663, %v665
        %v668 = vsel %vm666, %v665, %v663
        %v669 = vld [vmem:[#allocation2] sm:$0xff]
        %v670 = vld [vmem:[#allocation2 + $0x8] sm:$0xff]
        %s671 = scalar_lea.vmem %s1, 56
        %v672 = vld [vmem:[%s671] sm:$0xff]
        %v674 = vsel %vm188, %v672, 0
        %v677 = vsel %vm192, %v667, 0
        %v680 = vsel %vm192, %v668, 0
        %682 = vmatpush.msra.mxu0 0.0
        %683 = vmatpush.msra.mxu0 0.0
        %684 = vmatpush.msra.mxu0 0.0
        %685 = vmatpush.msra.mxu0 0.0
        %686 = vmatpush.msra.mxu0 0.0
        %687 = vmatpush.msra.mxu0 0.0
        %688 = vmatpush.msra.mxu0 0.0
        %689 = vmatpush.msra.mxu0 0.0
        %690 = vmatpush.msra.mxu0 0.0
        %691 = vmatpush.msra.mxu0 0.0
        %692 = vmatpush.msra.mxu0 0.0
        %693 = vmatpush.msra.mxu0 0.0
        %694 = vmatpush.msra.mxu0 0.0
        %695 = vmatpush.msra.mxu0 0.0
        %696 = vmatpush.msra.mxu0 0.0
        %697 = vmatpush.msra.mxu0 %v677
        %698 = vmatmul.f32.gmra.mxu0 %v674
        %v699 = vpop.f32.mrf.mxu0
        %v700 = vadd.f32 0.0, %v699
        %701 = vdwg.mxu0
        %702 = vmatpush.msra.mxu0 0.0
        %703 = vmatpush.msra.mxu0 0.0
        %704 = vmatpush.msra.mxu0 0.0
        %705 = vmatpush.msra.mxu0 0.0
        %706 = vmatpush.msra.mxu0 0.0
        %707 = vmatpush.msra.mxu0 0.0
        %708 = vmatpush.msra.mxu0 0.0
        %709 = vmatpush.msra.mxu0 0.0
        %710 = vmatpush.msra.mxu0 0.0
        %711 = vmatpush.msra.mxu0 0.0
        %712 = vmatpush.msra.mxu0 0.0
        %713 = vmatpush.msra.mxu0 0.0
        %714 = vmatpush.msra.mxu0 0.0
        %715 = vmatpush.msra.mxu0 0.0
        %716 = vmatpush.msra.mxu0 0.0
        %717 = vmatpush.msra.mxu0 %v680
        %718 = vmatmul.f32.gmra.mxu0 %v674
        %v719 = vpop.f32.mrf.mxu0
        %v720 = vadd.f32 0.0, %v719
        %721 = vdwg.mxu0
        %v722 = vadd.f32 %v669, %v700
        %v723 = vadd.f32 %v670, %v720
        %724 = vst [vmem:[#allocation2] sm:$0xff] %v722
        %725 = vst [vmem:[#allocation2 + $0x8] sm:$0xff] %v723
        %726 = vst [vmem:[#allocation1] ss:$2 sm:$0xff] %v172
        %v727 = vld.sshfl [vmem:[#allocation1] sm:$0xff pattern:$0x75316420]
        %v728 = vld.sshfl [vmem:[#allocation1 + $0x8] sm:$0xff pattern:$0x75316420]
        %731 = vrot.lane.b32.xlu0 %v727, 94
        %v732 = vpop.permute.xlu0 %731
        %733 = vrot.lane.b32.xlu0 %v728, 94
        %v734 = vpop.permute.xlu0 %733
        %vm735 = vcmp.lt.s32.totalorder %v251, 94
        %v736 = vsel %vm735, %v732, %v734
        %v737 = vsel %vm735, %v734, %v732
        %v738 = vld [vmem:[#allocation2] sm:$0xff]
        %v739 = vld [vmem:[#allocation2 + $0x8] sm:$0xff]
        %s740 = scalar_lea.vmem %s1, 64
        %v741 = vld [vmem:[%s740] sm:$0xff]
        %v743 = vsel %vm188, %v741, 0
        %v746 = vsel %vm192, %v736, 0
        %v749 = vsel %vm192, %v737, 0
        %751 = vmatpush.msra.mxu0 0.0
        %752 = vmatpush.msra.mxu0 0.0
        %753 = vmatpush.msra.mxu0 0.0
        %754 = vmatpush.msra.mxu0 0.0
        %755 = vmatpush.msra.mxu0 0.0
        %756 = vmatpush.msra.mxu0 0.0
        %757 = vmatpush.msra.mxu0 0.0
        %758 = vmatpush.msra.mxu0 0.0
        %759 = vmatpush.msra.mxu0 0.0
        %760 = vmatpush.msra.mxu0 0.0
        %761 = vmatpush.msra.mxu0 0.0
        %762 = vmatpush.msra.mxu0 0.0
        %763 = vmatpush.msra.mxu0 0.0
        %764 = vmatpush.msra.mxu0 0.0
        %765 = vmatpush.msra.mxu0 0.0
        %766 = vmatpush.msra.mxu0 %v746
        %767 = vmatmul.f32.gmra.mxu0 %v743
        %v768 = vpop.f32.mrf.mxu0
        %v769 = vadd.f32 0.0, %v768
        %770 = vdwg.mxu0
        %771 = vmatpush.msra.mxu0 0.0
        %772 = vmatpush.msra.mxu0 0.0
        %773 = vmatpush.msra.mxu0 0.0
        %774 = vmatpush.msra.mxu0 0.0
        %775 = vmatpush.msra.mxu0 0.0
        %776 = vmatpush.msra.mxu0 0.0
        %777 = vmatpush.msra.mxu0 0.0
        %778 = vmatpush.msra.mxu0 0.0
        %779 = vmatpush.msra.mxu0 0.0
        %780 = vmatpush.msra.mxu0 0.0
        %781 = vmatpush.msra.mxu0 0.0
        %782 = vmatpush.msra.mxu0 0.0
        %783 = vmatpush.msra.mxu0 0.0
        %784 = vmatpush.msra.mxu0 0.0
        %785 = vmatpush.msra.mxu0 0.0
        %786 = vmatpush.msra.mxu0 %v749
        %787 = vmatmul.f32.gmra.mxu0 %v743
        %v788 = vpop.f32.mrf.mxu0
        %v789 = vadd.f32 0.0, %v788
        %790 = vdwg.mxu0
        %v791 = vadd.f32 %v738, %v769
        %v792 = vadd.f32 %v739, %v789
        %793 = vst [vmem:[#allocation2] sm:$0xff] %v791
        %794 = vst [vmem:[#allocation2 + $0x8] sm:$0xff] %v792
        %v795 = vld [vmem:[#allocation2] sm:$0xff]
        %v796 = vld [vmem:[#allocation2 + $0x8] sm:$0xff]
        %797 = vst [vmem:[%s164] sm:$0xff] %v795
        %798 = vst [vmem:[%s164 + $0x8] sm:$0xff] %v796
        %s799 = sand.u32 %s93, 1
        %s800 = scalar_lea.sflag [#allocation4], %s799
        %s801 = sand.u32 %s93, 1
        %s802 = smul.addr %s801, 16
        %s803 = scalar_lea.vmem [#allocation3], %s802
        // Predicated region
        $region33: #{tpu_custom_call.1} parent=31 // pred_check
          %p804 = pneg %p103
        $region34: #{tpu_custom_call.1} parent=31 // pred_check_branch
          %806 = sbr.rel (%p804) target = $region36
        $region35: #{tpu_custom_call.1} parent=31 // pred_region
          %s807 = smul.u32 2, %s17
          %809 = vsyncadd %s800, 0
          %s810 = smul.addr %s807, 8
          %s811 = scalar_lea.hbm %s3, %s810
          %s813 = sshll.u32 %s803, 4
          %s814 = int_to_ptr.vmem [resolvable:$true] %s813
          %s815 = sshll.u32 %s811, 4
          %s816 = int_to_ptr.hbm [resolvable:$true] %s815
          %818 = dma.vmem_to_hbm [thread:$0]  %s814, 256, %s816, %s800
        $region36: #{tpu_custom_call.1} parent=31 // pred_fallthru
          _
      $region32: #{tpu_custom_call.1} parent=5 // pred_fallthru
        _
      %p819 = scmp.le.s32.totalorder 2, %s12
      // Predicated region
      $region37: #{tpu_custom_call.1} parent=5 // pred_check
        %p820 = pneg %p819
      $region38: #{tpu_custom_call.1} parent=5 // pred_check_branch
        %822 = sbr.rel (%p820) target = $region40
      $region39: #{tpu_custom_call.1} parent=5 // pred_region
        %s823 = ssub.s32 %s12, 2
        // Predicated region
        $region41: #{tpu_custom_call.1} parent=39 // pred_check
          %p824 = pneg %p109
        $region42: #{tpu_custom_call.1} parent=39 // pred_check_branch
          %826 = sbr.rel (%p824) target = $region44
        $region43: #{tpu_custom_call.1} parent=39 // pred_region
          %s827 = sand.u32 %s94, 1
          %s828 = scalar_lea.sflag [#allocation4], %s827
          %s829 = sand.u32 %s94, 1
          %s830 = smul.addr %s829, 16
          %s831 = scalar_lea.vmem [#allocation3], %s830
          %833 = dma.done %s828, 256
        $region44: #{tpu_custom_call.1} parent=39 // pred_fallthru
          _
      $region40: #{tpu_custom_call.1} parent=5 // pred_fallthru
        _
    $region6: #{tpu_custom_call.1} parent=1 // loop_footer
      %s16 = sadd.s32 1, %s12
    $region7: #{tpu_custom_call.1} parent=1 // loop_footer_branch
      %11 = sbr.rel target = $region3
    $region8: #{tpu_custom_call.1} parent=1 // loop_exit
      _
    %834 = vsyncpa [#allocation4], 1
    %s835 = scalar_lea.sflag [#allocation4], 1
    %836 = vsyncpa %s835, 1

</llo_original>
